<compile_context>
chip_gen: v5e
topology: v5e:2x2
jax: 0.10.0
libtpu: 0.0.40
codegen_flags: <defaults>
</compile_context>

<pallas_src>
import functools

import jax
import jax.numpy as jnp
from jax.experimental import pallas as pl
from jax.experimental.pallas import tpu as pltpu

LANES = 128


def _unet_loss_kernel(w_ref, t_ref, x_ref, out_ref, acc_ref, *, num_classes):
    """One (batch i, chunk c, pixel-tile j) step on dense (Ts, 128) tiles."""
    j = pl.program_id(2)  # reduction axis is the innermost grid dimension

    @pl.when(j == 0)
    def _():
        acc_ref[...] = jnp.zeros_like(acc_ref)

    w = w_ref[0].astype(jnp.float32)  # (Ts, 128) pixel weights
    t = t_ref[0]                      # (Ts, 128) int32 class ids
    # NOTE: out-of-range targets (t < 0 or t >= C) silently yield x_t = 0
    # (loss becomes w*logsumexp) instead of erroring like PyTorch's one_hot.

    if num_classes <= 8:
        # Small C: load each class slice once, fold target-select into the max
        # pass; everything is VPU/EUP work on dense (Ts, 128) tiles.
        xs = [x_ref[c].astype(jnp.float32) for c in range(num_classes)]
        m = xs[0]
        x_t = jnp.where(t == 0, xs[0], 0.0)
        for c in range(1, num_classes):
            m = jnp.maximum(m, xs[c])
            x_t = jnp.where(t == c, xs[c], x_t)
        s = jnp.exp(xs[0] - m)
        for c in range(1, num_classes):
            s = s + jnp.exp(xs[c] - m)
    else:
        # Large C: bounded loops (no huge unrolled body / live ranges).
        x0 = x_ref[0].astype(jnp.float32)

        def max_sel(c, carry):
            m, x_t = carry
            xc = x_ref[c].astype(jnp.float32)
            return jnp.maximum(m, xc), jnp.where(t == c, xc, x_t)

        m, x_t = jax.lax.fori_loop(
            1, num_classes, max_sel, (x0, jnp.where(t == 0, x0, 0.0)))

        def sum_exp(c, s):
            xc = x_ref[c].astype(jnp.float32)
            return s + jnp.exp(xc - m)

        s = jax.lax.fori_loop(1, num_classes, sum_exp, jnp.exp(x0 - m))

    nll = (jnp.log(s) + m) - x_t          # logsumexp(x) - x[target]
    acc_ref[...] += w * nll               # dense (Ts, 128) partial sums

    # One sublane reduction + one lane-dense (1, 128) store per (batch, chunk).
    @pl.when(j == pl.num_programs(2) - 1)
    def _():
        out_ref[...] = jnp.sum(acc_ref[...], axis=0, keepdims=True)


def unet_loss(logits, target, weight_map, num_classes, *,
              vmem_block_budget_bytes=12 * 1024 * 1024,
              max_tile_rows=1024):
    """JAX wrapper: NCHW-native reshapes only (no transpose), large dense tiles."""
    N, C, H, W = logits.shape
    assert C == num_classes
    HW = H * W

    # Tile-row budget: double-buffered input blocks + single f32 accumulator.
    dx = jnp.dtype(logits.dtype).itemsize
    dw = jnp.dtype(weight_map.dtype).itemsize
    bytes_per_row = LANES * (C * dx + 4 + dw)          # logits + int32 tgt + weight
    ts_budget = vmem_block_budget_bytes // (2 * bytes_per_row + LANES * 4)
    ts_cap = max(8, min(max_tile_rows, (ts_budget // 8) * 8))

    R = pl.cdiv(HW, LANES)                             # pixel rows of 128 lanes

    if R <= ts_cap:
        Ts = R                                         # full-dim block: always legal
        R_pad = R
    else:
        Ts = 0
        for cand in range((min(ts_cap, R) // 8) * 8, 0, -8):
            if R % cand == 0:                          # exact divisor -> no padding
                Ts = cand
                break
        if Ts:
            R_pad = R
        else:
            # Rare ragged fallback: pad the pixel axis (one extra HBM copy).
            # Padded logits are 0 (finite) and padded weights are 0, so the
            # extra pixels contribute exactly nothing to the sum.
            Ts = ts_cap
            R_pad = pl.cdiv(R, Ts) * Ts
    HW_pad = R_pad * LANES

    x = logits.reshape(N, C, HW)                       # pure reshapes, no transpose
    w = weight_map.reshape(N, 1, HW)
    t = target.reshape(N, 1, HW).astype(jnp.int32)
    if HW_pad != HW:
        pad = HW_pad - HW
        x = jnp.pad(x, ((0, 0), (0, 0), (0, pad)))
        w = jnp.pad(w, ((0, 0), (0, 0), (0, pad)))
        t = jnp.pad(t, ((0, 0), (0, 0), (0, pad)))

    # Metadata-only split of the pixel axis onto (sublane rows, 128 lanes).
    x = x.reshape(N, C, R_pad, LANES)
    w = w.reshape(N, 1, R_pad, LANES)
    t = t.reshape(N, 1, R_pad, LANES)

    steps_total = R_pad // Ts
    # Split the reduction into two independent halves so both v7x TensorCores
    # get work even when N == 1 (harmless on single-core v5e/v6e).
    K = 2 if (steps_total % 2 == 0 and steps_total >= 2) else 1
    spc = steps_total // K

    grid = (N, K, spc)
    kernel = functools.partial(_unet_loss_kernel, num_classes=num_classes)

    partials = pl.pallas_call(
        kernel,
        out_shape=jax.ShapeDtypeStruct((N, K, 1, LANES), jnp.float32),
        grid_spec=pltpu.PrefetchScalarGridSpec(
            num_scalar_prefetch=0,
            grid=grid,
            in_specs=[
                pl.BlockSpec((None, 1, Ts, LANES),
                             lambda i, c, j: (i, 0, c * spc + j, 0)),  # weights
                pl.BlockSpec((None, 1, Ts, LANES),
                             lambda i, c, j: (i, 0, c * spc + j, 0)),  # targets
                pl.BlockSpec((None, C, Ts, LANES),
                             lambda i, c, j: (i, 0, c * spc + j, 0)),  # logits
            ],
            out_specs=pl.BlockSpec((None, None, 1, LANES),
                                   lambda i, c, j: (i, c, 0, 0)),
            scratch_shapes=[pltpu.VMEM((Ts, LANES), jnp.float32)],
        ),
        compiler_params=pltpu.CompilerParams(
            dimension_semantics=("parallel", "parallel", "arbitrary"),
            vmem_limit_bytes=32 * 1024 * 1024,   # explicit headroom (v5e default is 16 MiB)
        ),
    )(w, t, x)

    # loss.sum(dim=1).mean() in PyTorch == total weighted NLL / (N*H*W);
    # padded pixels contribute 0, so dividing by the true pixel count is exact.
    return jnp.sum(partials) / jnp.float32(N * H * W)


def unet_loss_reference(logits, target, weight_map, num_classes):
    """Pure-JAX reference mirroring the PyTorch forward."""
    log_probs = jax.nn.log_softmax(logits, axis=1)                     # (N,C,H,W)
    one_hot = jax.nn.one_hot(target, num_classes, dtype=jnp.float32)   # (N,H,W,C)
    one_hot = jnp.transpose(one_hot, (0, 3, 1, 2))                     # (N,C,H,W)
    loss = -weight_map * one_hot * log_probs
    return loss.sum(axis=1).mean()


if __name__ == "__main__":
    N, C, H, W = 2, 4, 16, 16
    num_classes = C

    key = jax.random.PRNGKey(0)
    k_logits, k_target, k_weight = jax.random.split(key, 3)

    logits = jax.random.normal(k_logits, (N, C, H, W), dtype=jnp.float32)
    target = jax.random.randint(k_target, (N, H, W), 0, num_classes, dtype=jnp.int32)
    # Deterministic "parameter" of the module: per-pixel weight map (N,1,H,W).
    weight_map = jax.random.uniform(
        k_weight, (N, 1, H, W), dtype=jnp.float32, minval=0.5, maxval=1.5
    )

    loss = unet_loss(logits, target, weight_map, num_classes)
    loss = jax.block_until_ready(loss)

    ref = unet_loss_reference(logits, target, weight_map, num_classes)
    assert jnp.allclose(loss, ref, rtol=1e-5, atol=1e-5), (loss, ref)

    print("KERNEL_OK")
</pallas_src>

<mosaic_0001>
module attributes {stable_mosaic.version = 11 : i64} {
  func.func @_unet_loss_kernel(%arg0: i32, %arg1: i32, %arg2: i32, %arg3: memref<1x1x2x128xf32, #tpu.memory_space<vmem>>, %arg4: memref<1x1x2x128xi32, #tpu.memory_space<vmem>>, %arg5: memref<1x4x2x128xf32, #tpu.memory_space<vmem>>, %arg6: memref<1x1x1x128xf32, #tpu.memory_space<vmem>>, %arg7: memref<2x128xf32, #tpu.memory_space<vmem>>) attributes {dimension_semantics = [#tpu.dimension_semantics<parallel>, #tpu.dimension_semantics<parallel>, #tpu.dimension_semantics<arbitrary>], iteration_bounds = array<i64: 2, 1, 1>, scalar_prefetch = 0 : i64, scratch_operands = 1 : i64, tpu.core_type = #tpu.core_type<tc>, window_params = [{transform_indices = @transform_0, window_bounds = array<i64: 1, 1, 2, 128>}, {transform_indices = @transform_1, window_bounds = array<i64: 1, 1, 2, 128>}, {transform_indices = @transform_2, window_bounds = array<i64: 1, 4, 2, 128>}, {transform_indices = @transform_3, window_bounds = array<i64: 1, 1, 1, 128>}]} {
    %c0_i32 = arith.constant 0 : i32
    %0 = arith.cmpi eq, %arg2, %c0_i32 : i32
    %1 = arith.extui %0 : i1 to i32
    %c0_i32_0 = arith.constant 0 : i32
    %2 = arith.cmpi ne, %1, %c0_i32_0 : i32
    scf.if %2 {
      %cst_28 = arith.constant 0.000000e+00 : f32
      %52 = vector.broadcast %cst_28 : f32 to vector<2x128xf32>
      %c0_29 = arith.constant 0 : index
      %c0_30 = arith.constant 0 : index
      %53 = vector.load %arg7[%c0_29, %c0_30] : memref<2x128xf32, #tpu.memory_space<vmem>>, vector<2x128xf32>
      tpu.vector_store %arg7[%c0_29, %c0_30], %52 {strides = array<i32>} : memref<2x128xf32, #tpu.memory_space<vmem>>, vector<2x128xf32>,
    } else {
    }
    %c0 = arith.constant 0 : index
    %c0_1 = arith.constant 0 : index
    %c0_2 = arith.constant 0 : index
    %c0_3 = arith.constant 0 : index
    %3 = vector.load %arg3[%c0, %c0_1, %c0_2, %c0_3] : memref<1x1x2x128xf32, #tpu.memory_space<vmem>>, vector<1x1x2x128xf32>
    %4 = vector.shape_cast %3 : vector<1x1x2x128xf32> to vector<2x128xf32>
    %c0_4 = arith.constant 0 : index
    %c0_5 = arith.constant 0 : index
    %c0_6 = arith.constant 0 : index
    %c0_7 = arith.constant 0 : index
    %5 = vector.load %arg4[%c0_4, %c0_5, %c0_6, %c0_7] : memref<1x1x2x128xi32, #tpu.memory_space<vmem>>, vector<1x1x2x128xi32>
    %6 = vector.shape_cast %5 : vector<1x1x2x128xi32> to vector<2x128xi32>
    %c0_8 = arith.constant 0 : index
    %c0_9 = arith.constant 0 : index
    %c0_10 = arith.constant 0 : index
    %c0_11 = arith.constant 0 : index
    %7 = vector.load %arg5[%c0_8, %c0_9, %c0_10, %c0_11] : memref<1x4x2x128xf32, #tpu.memory_space<vmem>>, vector<1x1x2x128xf32>
    %8 = vector.shape_cast %7 : vector<1x1x2x128xf32> to vector<2x128xf32>
    %c0_12 = arith.constant 0 : index
    %c1 = arith.constant 1 : index
    %c0_13 = arith.constant 0 : index
    %c0_14 = arith.constant 0 : index
    %9 = vector.load %arg5[%c0_12, %c1, %c0_13, %c0_14] : memref<1x4x2x128xf32, #tpu.memory_space<vmem>>, vector<1x1x2x128xf32>
    %10 = vector.shape_cast %9 : vector<1x1x2x128xf32> to vector<2x128xf32>
    %c0_15 = arith.constant 0 : index
    %c2 = arith.constant 2 : index
    %c0_16 = arith.constant 0 : index
    %c0_17 = arith.constant 0 : index
    %11 = vector.load %arg5[%c0_15, %c2, %c0_16, %c0_17] : memref<1x4x2x128xf32, #tpu.memory_space<vmem>>, vector<1x1x2x128xf32>
    %12 = vector.shape_cast %11 : vector<1x1x2x128xf32> to vector<2x128xf32>
    %c0_18 = arith.constant 0 : index
    %c3 = arith.constant 3 : index
    %c0_19 = arith.constant 0 : index
    %c0_20 = arith.constant 0 : index
    %13 = vector.load %arg5[%c0_18, %c3, %c0_19, %c0_20] : memref<1x4x2x128xf32, #tpu.memory_space<vmem>>, vector<1x1x2x128xf32>
    %14 = vector.shape_cast %13 : vector<1x1x2x128xf32> to vector<2x128xf32>
    %c0_i32_21 = arith.constant 0 : i32
    %15 = vector.broadcast %c0_i32_21 : i32 to vector<2x128xi32>
    %16 = arith.cmpi eq, %6, %15 : vector<2x128xi32>
    %cst = arith.constant 0.000000e+00 : f32
    %17 = vector.broadcast %cst : f32 to vector<2x128xf32>
    %18 = arith.select %16, %8, %17 : vector<2x128xi1>, vector<2x128xf32>
    %19 = arith.maximumf %8, %10 : vector<2x128xf32>
    %c1_i32 = arith.constant 1 : i32
    %20 = vector.broadcast %c1_i32 : i32 to vector<2x128xi32>
    %21 = arith.cmpi eq, %6, %20 : vector<2x128xi32>
    %22 = arith.select %21, %10, %18 : vector<2x128xi1>, vector<2x128xf32>
    %23 = arith.maximumf %19, %12 : vector<2x128xf32>
    %c2_i32 = arith.constant 2 : i32
    %24 = vector.broadcast %c2_i32 : i32 to vector<2x128xi32>
    %25 = arith.cmpi eq, %6, %24 : vector<2x128xi32>
    %26 = arith.select %25, %12, %22 : vector<2x128xi1>, vector<2x128xf32>
    %27 = arith.maximumf %23, %14 : vector<2x128xf32>
    %c3_i32 = arith.constant 3 : i32
    %28 = vector.broadcast %c3_i32 : i32 to vector<2x128xi32>
    %29 = arith.cmpi eq, %6, %28 : vector<2x128xi32>
    %30 = arith.select %29, %14, %26 : vector<2x128xi1>, vector<2x128xf32>
    %31 = arith.subf %8, %27 : vector<2x128xf32>
    %32 = math.exp %31 : vector<2x128xf32>
    %33 = arith.subf %10, %27 : vector<2x128xf32>
    %34 = math.exp %33 : vector<2x128xf32>
    %35 = arith.addf %32, %34 : vector<2x128xf32>
    %36 = arith.subf %12, %27 : vector<2x128xf32>
    %37 = math.exp %36 : vector<2x128xf32>
    %38 = arith.addf %35, %37 : vector<2x128xf32>
    %39 = arith.subf %14, %27 : vector<2x128xf32>
    %40 = math.exp %39 : vector<2x128xf32>
    %41 = arith.addf %38, %40 : vector<2x128xf32>
    %42 = math.log %41 : vector<2x128xf32>
    %43 = arith.addf %42, %27 : vector<2x128xf32>
    %44 = arith.subf %43, %30 : vector<2x128xf32>
    %c0_22 = arith.constant 0 : index
    %c0_23 = arith.constant 0 : index
    %45 = vector.load %arg7[%c0_22, %c0_23] : memref<2x128xf32, #tpu.memory_space<vmem>>, vector<2x128xf32>
    %46 = arith.mulf %4, %44 : vector<2x128xf32>
    %47 = arith.addf %45, %46 : vector<2x128xf32>
    %c0_24 = arith.constant 0 : index
    %c0_25 = arith.constant 0 : index
    %48 = vector.load %arg7[%c0_24, %c0_25] : memref<2x128xf32, #tpu.memory_space<vmem>>, vector<2x128xf32>
    tpu.vector_store %arg7[%c0_24, %c0_25], %47 {strides = array<i32>} : memref<2x128xf32, #tpu.memory_space<vmem>>, vector<2x128xf32>,
    %c0_i32_26 = arith.constant 0 : i32
    %49 = arith.cmpi eq, %arg2, %c0_i32_26 : i32
    %50 = arith.extui %49 : i1 to i32
    %c0_i32_27 = arith.constant 0 : i32
    %51 = arith.cmpi ne, %50, %c0_i32_27 : i32
    scf.if %51 {
      %c0_28 = arith.constant 0 : index
      %c0_29 = arith.constant 0 : index
      %52 = vector.load %arg7[%c0_28, %c0_29] : memref<2x128xf32, #tpu.memory_space<vmem>>, vector<2x128xf32>
      %cst_30 = arith.constant dense<0.000000e+00> : vector<128xf32>
      %53 = vector.multi_reduction <add>, %52, %cst_30 [0] : vector<2x128xf32> to vector<128xf32>
      %54 = vector.shape_cast %53 : vector<128xf32> to vector<1x128xf32>
      %c0_31 = arith.constant 0 : index
      %c0_32 = arith.constant 0 : index
      %c0_33 = arith.constant 0 : index
      %c0_34 = arith.constant 0 : index
      %55 = vector.load %arg6[%c0_31, %c0_32, %c0_33, %c0_34] : memref<1x1x1x128xf32, #tpu.memory_space<vmem>>, vector<1x1x1x128xf32>
      %56 = vector.shape_cast %55 : vector<1x1x1x128xf32> to vector<1x128xf32>
      %57 = vector.shape_cast %54 : vector<1x128xf32> to vector<1x1x1x128xf32>
      tpu.vector_store %arg6[%c0_31, %c0_32, %c0_33, %c0_34], %57 {strides = array<i32>} : memref<1x1x1x128xf32, #tpu.memory_space<vmem>>, vector<1x1x1x128xf32>,
    } else {
    }
    return
  }
  func.func @transform_0(%arg0: i32, %arg1: i32, %arg2: i32) -> (i32, i32, i32, i32) {
    %c1_i32 = arith.constant 1 : i32
    %0 = arith.muli %arg1, %c1_i32 : i32
    %1 = arith.addi %0, %arg2 : i32
    %c0_i32 = arith.constant 0 : i32
    %c0_i32_0 = arith.constant 0 : i32
    %c0_i32_1 = arith.constant 0 : i32
    return %arg0, %c0_i32, %1, %c0_i32_0 : i32, i32, i32, i32
  }
  func.func @transform_1(%arg0: i32, %arg1: i32, %arg2: i32) -> (i32, i32, i32, i32) {
    %c1_i32 = arith.constant 1 : i32
    %0 = arith.muli %arg1, %c1_i32 : i32
    %1 = arith.addi %0, %arg2 : i32
    %c0_i32 = arith.constant 0 : i32
    %c0_i32_0 = arith.constant 0 : i32
    %c0_i32_1 = arith.constant 0 : i32
    return %arg0, %c0_i32, %1, %c0_i32_0 : i32, i32, i32, i32
  }
  func.func @transform_2(%arg0: i32, %arg1: i32, %arg2: i32) -> (i32, i32, i32, i32) {
    %c1_i32 = arith.constant 1 : i32
    %0 = arith.muli %arg1, %c1_i32 : i32
    %1 = arith.addi %0, %arg2 : i32
    %c0_i32 = arith.constant 0 : i32
    %c0_i32_0 = arith.constant 0 : i32
    %c0_i32_1 = arith.constant 0 : i32
    return %arg0, %c0_i32, %1, %c0_i32_0 : i32, i32, i32, i32
  }
  func.func @transform_3(%arg0: i32, %arg1: i32, %arg2: i32) -> (i32, i32, i32, i32) {
    %c0_i32 = arith.constant 0 : i32
    %c0_i32_0 = arith.constant 0 : i32
    %c0_i32_1 = arith.constant 0 : i32
    return %arg0, %arg1, %c0_i32, %c0_i32_0 : i32, i32, i32, i32
  }
}

</mosaic_0001>

<llo_original>
// kernel: tpu_custom_call.1
$region0: #{tpu_custom_call.1}
  #allocation0 [shape = 'u32[]', space=smem, size = 0x4, offset = 0x4, fixed_abs, tag = 'smem constant byte address 0x4 - core index']
  #allocation1 [shape = 'u32[72,128]{1,0:T(1,128)}', space=vmem, size = 0x9000, scoped, tag = 'internal scratch']
  #allocation2 [shape = 'f32[2,128]{1,0:T(2,128)}', space=vmem, size = 0x400, scoped, tag = 'scratch operand']
  %s0 = inlined_call_operand.hbm [shape: f32[2,1,2,128], index: 0, kind: input, shape index: {}]
  %s1 = inlined_call_operand.hbm [shape: s32[2,1,2,128], index: 1, kind: input, shape index: {}]
  %s2 = inlined_call_operand.hbm [shape: f32[2,4,2,128], index: 2, kind: input, shape index: {}]
  %s3 = inlined_call_operand.hbm [shape: f32[2,1,1,128], index: 3, kind: output, shape index: {}]
  %s4 = sld [smem:[#allocation0]]
  $region65: #{tpu_custom_call.1} parent=0
    _
  %s6 = ssub.s32 1, %s4
  %s7 = scalar_select 0, %s6, %s4
  $region1: #{tpu_custom_call.1} parent=0
    #allocation3 [shape = 'u8[2048]{0}', space=vmem, size = 0x800, scoped, tag = 'input window, operand 0']
    #allocation4 [shape = 's32[2]{0}', space=sflag, size = 0x8, scoped, tag = 'scoped memory for tpu_custom_call.1']
    #allocation5 [shape = 's32[2]{0}', space=sflag, size = 0x8, scoped, tag = 'scoped memory for tpu_custom_call.1']
    #allocation6 [shape = 'u8[2048]{0}', space=vmem, size = 0x800, scoped, tag = 'input window, operand 1']
    #allocation7 [shape = 's32[2]{0}', space=sflag, size = 0x8, scoped, tag = 'scoped memory for tpu_custom_call.1']
    #allocation8 [shape = 'u8[8192]{0}', space=vmem, size = 0x2000, scoped, tag = 'input window, operand 2']
    #allocation9 [shape = 'u8[1024]{0}', space=vmem, size = 0x400, scoped, tag = 'output window, operand 0']
    %8 = vsyncpa [#allocation4], 0
    %s9 = scalar_lea.sflag [#allocation4], 1
    %10 = vsyncpa %s9, 0
    %11 = vsyncpa [#allocation7], 0
    %s12 = scalar_lea.sflag [#allocation7], 1
    %13 = vsyncpa %s12, 0
    %14 = vsyncpa [#allocation5], 0
    %s15 = scalar_lea.sflag [#allocation5], 1
    %16 = vsyncpa %s15, 0
    loop: start=0, step=1, limit=4
    $region2: #{tpu_custom_call.1} parent=1 // loop_pre_header
      _
    $region3: #{tpu_custom_call.1} parent=1 // loop_header
      %s18 = sphi 0, %s22
      %p19 = scmp.ge.s32.totalorder %s18, 4
      %s25 = sphi 0, %s44
      %s26 = sphi 0, %s40
      %s27 = sphi 0, %s36
      %s28 = sphi 0, %s25
      %s29 = sphi 0, %s26
      %s30 = sphi 0, %s27
      %s31 = sphi 0, %s28
      %s32 = sphi 0, %s29
      %s33 = sphi 0, %s30
      %s51 = sphi 0, %s53
      %s54 = sphi 0, %s51
      %s55 = sphi 0, %s54
      %s71 = sphi 0, %s55
      %s81 = sphi 0, %s83
      %s84 = sphi 0, %s81
      %s85 = sphi 0, %s84
      %s101 = sphi 0, %s85
      %s111 = sphi 0, %s113
      %s114 = sphi 0, %s111
      %s115 = sphi 0, %s114
      %s131 = sphi 0, %s115
      %s139 = sphi 0, %s141
      %s142 = sphi 0, %s139
      %s143 = sphi 0, %s142
      %s159 = sphi 0, %s143
    $region4: #{tpu_custom_call.1} parent=1 // loop_header_branch
      %21 = sbr.rel (%p19) target = $region8
    $region5: #{tpu_custom_call.1} parent=1 // loop_body
      %s23 = ssub.s32 %s18, 1
      %s24 = ssub.s32 %s18, 2
      %s34 = sadd.s32 1, %s27
      %p35 = scmp.ge.s32.totalorder %s34, 1
      %s36 = scalar_select %p35, 0, %s34
      %s37 = sadd.s32 1, %s26
      %s38 = scalar_select %p35, %s37, %s26
      %p39 = scmp.ge.s32.totalorder %s38, 1
      %s40 = scalar_select %p39, 0, %s38
      %s41 = sadd.s32 1, %s25
      %s42 = scalar_select %p39, %s41, %s25
      %p43 = scmp.ge.s32.totalorder %s42, 2
      %s44 = scalar_select %p43, 0, %s42
      %s45 = sadd.s32 %s26, %s27
      %s46 = sadd.s32 %s40, %s36
      %s47 = ssub.s32 %s25, %s44
      %s48 = ssub.s32 %s45, %s46
      %s49 = sor.u32 %s47, %s48
      %p50 = scmp.eq.s32.totalorder %s49, 0
      %s52 = sadd.s32 %s51, 1
      %s53 = scalar_select %p50, %s51, %s52
      %p56 = pneg %p50
      %p57 = scmp.eq.s32.totalorder %s18, 1
      %p58 = por %p56, %p57
      %p59 = scmp.ne.s32.totalorder %s51, %s54
      %p60 = scmp.eq.s32.totalorder %s18, 0
      %p61 = por %p59, %p60
      %p62 = scmp.ne.s32.totalorder %s51, %s54
      %p63 = scmp.eq.s32.totalorder %s23, 1
      %p64 = por %p62, %p63
      %p65 = scmp.ne.s32.totalorder %s54, %s55
      %p66 = scmp.eq.s32.totalorder %s23, 0
      %p67 = por %p65, %p66
      %p68 = scmp.ne.s32.totalorder %s54, %s55
      %p69 = scmp.eq.s32.totalorder %s24, 1
      %p70 = por %p68, %p69
      %p72 = scmp.ne.s32.totalorder %s55, %s71
      %p73 = scmp.eq.s32.totalorder %s24, 0
      %p74 = por %p72, %p73
      %s75 = sadd.s32 %s26, %s27
      %s76 = sadd.s32 %s40, %s36
      %s77 = ssub.s32 %s25, %s44
      %s78 = ssub.s32 %s75, %s76
      %s79 = sor.u32 %s77, %s78
      %p80 = scmp.eq.s32.totalorder %s79, 0
      %s82 = sadd.s32 %s81, 1
      %s83 = scalar_select %p80, %s81, %s82
      %p86 = pneg %p80
      %p87 = scmp.eq.s32.totalorder %s18, 1
      %p88 = por %p86, %p87
      %p89 = scmp.ne.s32.totalorder %s81, %s84
      %p90 = scmp.eq.s32.totalorder %s18, 0
      %p91 = por %p89, %p90
      %p92 = scmp.ne.s32.totalorder %s81, %s84
      %p93 = scmp.eq.s32.totalorder %s23, 1
      %p94 = por %p92, %p93
      %p95 = scmp.ne.s32.totalorder %s84, %s85
      %p96 = scmp.eq.s32.totalorder %s23, 0
      %p97 = por %p95, %p96
      %p98 = scmp.ne.s32.totalorder %s84, %s85
      %p99 = scmp.eq.s32.totalorder %s24, 1
      %p100 = por %p98, %p99
      %p102 = scmp.ne.s32.totalorder %s85, %s101
      %p103 = scmp.eq.s32.totalorder %s24, 0
      %p104 = por %p102, %p103
      %s105 = sadd.s32 %s26, %s27
      %s106 = sadd.s32 %s40, %s36
      %s107 = ssub.s32 %s25, %s44
      %s108 = ssub.s32 %s105, %s106
      %s109 = sor.u32 %s107, %s108
      %p110 = scmp.eq.s32.totalorder %s109, 0
      %s112 = sadd.s32 %s111, 1
      %s113 = scalar_select %p110, %s111, %s112
      %p116 = pneg %p110
      %p117 = scmp.eq.s32.totalorder %s18, 1
      %p118 = por %p116, %p117
      %p119 = scmp.ne.s32.totalorder %s111, %s114
      %p120 = scmp.eq.s32.totalorder %s18, 0
      %p121 = por %p119, %p120
      %p122 = scmp.ne.s32.totalorder %s111, %s114
      %p123 = scmp.eq.s32.totalorder %s23, 1
      %p124 = por %p122, %p123
      %p125 = scmp.ne.s32.totalorder %s114, %s115
      %p126 = scmp.eq.s32.totalorder %s23, 0
      %p127 = por %p125, %p126
      %p128 = scmp.ne.s32.totalorder %s114, %s115
      %p129 = scmp.eq.s32.totalorder %s24, 1
      %p130 = por %p128, %p129
      %p132 = scmp.ne.s32.totalorder %s115, %s131
      %p133 = scmp.eq.s32.totalorder %s24, 0
      %p134 = por %p132, %p133
      %s135 = ssub.s32 %s25, %s44
      %s136 = ssub.s32 %s26, %s40
      %s137 = sor.u32 %s135, %s136
      %p138 = scmp.eq.s32.totalorder %s137, 0
      %s140 = sadd.s32 %s139, 1
      %s141 = scalar_select %p138, %s139, %s140
      %p144 = pneg %p138
      %p145 = scmp.eq.s32.totalorder %s18, 1
      %p146 = por %p144, %p145
      %p147 = scmp.ne.s32.totalorder %s139, %s142
      %p148 = scmp.eq.s32.totalorder %s18, 0
      %p149 = por %p147, %p148
      %p150 = scmp.ne.s32.totalorder %s139, %s142
      %p151 = scmp.eq.s32.totalorder %s23, 1
      %p152 = por %p150, %p151
      %p153 = scmp.ne.s32.totalorder %s142, %s143
      %p154 = scmp.eq.s32.totalorder %s23, 0
      %p155 = por %p153, %p154
      %p156 = scmp.ne.s32.totalorder %s142, %s143
      %p157 = scmp.eq.s32.totalorder %s24, 1
      %p158 = por %p156, %p157
      %p160 = scmp.ne.s32.totalorder %s143, %s159
      %p161 = scmp.eq.s32.totalorder %s24, 0
      %p162 = por %p160, %p161
      %p163 = scmp.le.s32.totalorder 1, %s18
      %p164 = scmp.lt.s32.totalorder %s18, 3
      %p165 = pnand %p163, %p164
      %p166 = pneg %p165
      // Predicated region
      $region9: #{tpu_custom_call.1} parent=5 // pred_check
        _
      $region10: #{tpu_custom_call.1} parent=5 // pred_check_branch
        %168 = sbr.rel (%p165) target = $region12
      $region11: #{tpu_custom_call.1} parent=5 // pred_region
        %s169 = ssub.s32 %s18, 1
      $region12: #{tpu_custom_call.1} parent=5 // pred_fallthru
        _
      %p170 = scmp.lt.s32.totalorder %s18, 2
      // Predicated region
      $region13: #{tpu_custom_call.1} parent=5 // pred_check
        %p171 = pneg %p170
      $region14: #{tpu_custom_call.1} parent=5 // pred_check_branch
        %173 = sbr.rel (%p171) target = $region16
      $region15: #{tpu_custom_call.1} parent=5 // pred_region
        // Predicated region
        $region17: #{tpu_custom_call.1} parent=15 // pred_check
          %p174 = pneg %p61
        $region18: #{tpu_custom_call.1} parent=15 // pred_check_branch
          %176 = sbr.rel (%p174) target = $region20
        $region19: #{tpu_custom_call.1} parent=15 // pred_region
          %s177 = sand.u32 %s51, 1
          %s178 = scalar_lea.sflag [#allocation4], %s177
          %s179 = sand.u32 %s51, 1
          %s180 = smul.addr %s179, 2
          %s181 = scalar_lea.vmem [#allocation3], %s180
          %s182 = sadd.s32 %s26, %s27
          %184 = vsyncadd %s178, 0
          %s185 = sadd.s32 %s182, %s25
          %s186 = smul.addr %s185, 2
          %s187 = scalar_lea.hbm %s0, %s186
          %s189 = sshll.u32 %s187, 4
          %s190 = int_to_ptr.hbm [resolvable:$true] %s189
          %s191 = sshll.u32 %s181, 4
          %s192 = int_to_ptr.vmem [resolvable:$true] %s191
          %194 = dma.hbm_to_vmem [thread:$0]  %s190, 32, %s192, %s178
        $region20: #{tpu_custom_call.1} parent=15 // pred_fallthru
          _
        // Predicated region
        $region21: #{tpu_custom_call.1} parent=15 // pred_check
          %p195 = pneg %p91
        $region22: #{tpu_custom_call.1} parent=15 // pred_check_branch
          %197 = sbr.rel (%p195) target = $region24
        $region23: #{tpu_custom_call.1} parent=15 // pred_region
          %s198 = sand.u32 %s18, 1
          %s199 = scalar_lea.sflag [#allocation7], %s198
          %s200 = sand.u32 %s81, 1
          %s201 = smul.addr %s200, 2
          %s202 = scalar_lea.vmem [#allocation6], %s201
          %s203 = sadd.s32 %s26, %s27
          %205 = vsyncadd %s199, 0
          %s206 = sadd.s32 %s203, %s25
          %s207 = smul.addr %s206, 2
          %s208 = scalar_lea.hbm %s1, %s207
          %s210 = sshll.u32 %s208, 4
          %s211 = int_to_ptr.hbm [resolvable:$true] %s210
          %s212 = sshll.u32 %s202, 4
          %s213 = int_to_ptr.vmem [resolvable:$true] %s212
          %215 = dma.hbm_to_vmem [thread:$0]  %s211, 32, %s213, %s199
        $region24: #{tpu_custom_call.1} parent=15 // pred_fallthru
          _
        // Predicated region
        $region25: #{tpu_custom_call.1} parent=15 // pred_check
          %p216 = pneg %p121
        $region26: #{tpu_custom_call.1} parent=15 // pred_check_branch
          %218 = sbr.rel (%p216) target = $region28
        $region27: #{tpu_custom_call.1} parent=15 // pred_region
          %s219 = sand.u32 %s18, 1
          %s220 = scalar_lea.sflag [#allocation7], %s219
          %s221 = sand.u32 %s111, 1
          %s222 = smul.addr %s221, 8
          %s223 = scalar_lea.vmem [#allocation8], %s222
          %s224 = sadd.s32 %s26, %s27
          %226 = vsyncadd %s220, 0
          %s227 = smul.addr %s25, 4
          %s228 = sadd.s32 %s224, %s227
          %s229 = smul.addr %s228, 2
          %s230 = scalar_lea.hbm %s2, %s229
          %s231 = sshll.u32 %s230, 4
          %s232 = int_to_ptr.hbm [resolvable:$true] %s231
          %s233 = sshll.u32 %s223, 4
          %s234 = int_to_ptr.vmem [resolvable:$true] %s233
          %239 = dma.hbm_to_vmem [thread:$0]  %s232, 128, %s234, %s220, 32, 32, 2
        $region28: #{tpu_custom_call.1} parent=15 // pred_fallthru
          _
      $region16: #{tpu_custom_call.1} parent=5 // pred_fallthru
        _
      %p240 = scmp.le.s32.totalorder 1, %s18
      %p241 = scmp.lt.s32.totalorder %s18, 3
      %p242 = pnand %p240, %p241
      %p243 = pneg %p242
      // Predicated region
      $region29: #{tpu_custom_call.1} parent=5 // pred_check
        _
      $region30: #{tpu_custom_call.1} parent=5 // pred_check_branch
        %245 = sbr.rel (%p242) target = $region32
      $region31: #{tpu_custom_call.1} parent=5 // pred_region
        %s246 = ssub.s32 %s18, 1
        %s247 = sand.u32 %s54, 1
        %s248 = scalar_lea.sflag [#allocation4], %s247
        %s249 = sand.u32 %s54, 1
        %s250 = smul.addr %s249, 2
        %s251 = scalar_lea.vmem [#allocation3], %s250
        // Predicated region
        $region33: #{tpu_custom_call.1} parent=31 // pred_check
          %p252 = pneg %p67
        $region34: #{tpu_custom_call.1} parent=31 // pred_check_branch
          %254 = sbr.rel (%p252) target = $region36
        $region35: #{tpu_custom_call.1} parent=31 // pred_region
          %256 = dma.done %s248, 32
        $region36: #{tpu_custom_call.1} parent=31 // pred_fallthru
          _
        %s257 = sand.u32 %s23, 1
        %s258 = scalar_lea.sflag [#allocation7], %s257
        %s259 = sand.u32 %s84, 1
        %s260 = smul.addr %s259, 2
        %s261 = scalar_lea.vmem [#allocation6], %s260
        // Predicated region
        $region37: #{tpu_custom_call.1} parent=31 // pred_check
          %p262 = pneg %p97
        $region38: #{tpu_custom_call.1} parent=31 // pred_check_branch
          %264 = sbr.rel (%p262) target = $region40
        $region39: #{tpu_custom_call.1} parent=31 // pred_region
          %266 = dma.done %s258, 32
        $region40: #{tpu_custom_call.1} parent=31 // pred_fallthru
          _
        %s267 = sand.u32 %s23, 1
        %s268 = scalar_lea.sflag [#allocation7], %s267
        %s269 = sand.u32 %s114, 1
        %s270 = smul.addr %s269, 8
        %s271 = scalar_lea.vmem [#allocation8], %s270
        // Predicated region
        $region41: #{tpu_custom_call.1} parent=31 // pred_check
          %p272 = pneg %p127
        $region42: #{tpu_custom_call.1} parent=31 // pred_check_branch
          %274 = sbr.rel (%p272) target = $region44
        $region43: #{tpu_custom_call.1} parent=31 // pred_region
          %276 = dma.done %s268, 128
        $region44: #{tpu_custom_call.1} parent=31 // pred_fallthru
          _
        %s277 = sand.u32 %s54, 1
        %s278 = scalar_lea.sflag [#allocation4], %s277
        %s279 = sand.u32 %s54, 1
        %s280 = smul.addr %s279, 2
        %s281 = scalar_lea.vmem [#allocation3], %s280
        %p282 = pneg %p67
        %p283 = pneg %p64
        %s284 = sand.u32 %s23, 1
        %s285 = scalar_lea.sflag [#allocation7], %s284
        %s286 = sand.u32 %s84, 1
        %s287 = smul.addr %s286, 2
        %s288 = scalar_lea.vmem [#allocation6], %s287
        %p289 = pneg %p97
        %p290 = pneg %p94
        %s291 = sand.u32 %s23, 1
        %s292 = scalar_lea.sflag [#allocation7], %s291
        %s293 = sand.u32 %s114, 1
        %s294 = smul.addr %s293, 8
        %s295 = scalar_lea.vmem [#allocation8], %s294
        %p296 = pneg %p127
        %p297 = pneg %p124
        %p298 = pneg %p155
        %p299 = pneg %p152
        %s300 = sand.u32 %s142, 1
        %s301 = scalar_lea.sflag [#allocation5], %s300
        %s302 = sand.u32 %s142, 1
        %s303 = scalar_lea.vmem [#allocation9], %s302
        %s304 = sadd.s32 %s29, %s30
        %s305 = sadd.s32 %s29, %s30
        %s306 = sadd.s32 %s29, %s30
        %p307 = scmp.eq.s32.totalorder %s30, 0
        // Predicated region
        $region45: #{tpu_custom_call.1} parent=31 // pred_check
          %p308 = pneg %p307
        $region46: #{tpu_custom_call.1} parent=31 // pred_check_branch
          %310 = sbr.rel (%p308) target = $region48
        $region47: #{tpu_custom_call.1} parent=31 // pred_region
          %311 = vst [vmem:[#allocation2] sm:$0x3] 0.0
        $region48: #{tpu_custom_call.1} parent=31 // pred_fallthru
          _
        %v312 = vld [vmem:[%s251] sm:$0x3]
        %v313 = vld [vmem:[%s261] sm:$0x3]
        %v314 = vld [vmem:[%s271] sm:$0x3]
        %s315 = scalar_lea.vmem %s271, 2 [#allocation8]
        %v316 = vld [vmem:[%s315] sm:$0x3]
        %s317 = scalar_lea.vmem %s271, 4 [#allocation8]
        %v318 = vld [vmem:[%s317] sm:$0x3]
        %s319 = scalar_lea.vmem %s271, 6 [#allocation8]
        %v320 = vld [vmem:[%s319] sm:$0x3]
        %vm321 = vcmp.eq.s32.totalorder %v313, 0
        %v322 = vsel %vm321, %v314, 0.0
        %v323 = vmax.f32 %v314, %v316
        %vm324 = vcmp.eq.s32.totalorder %v313, 1
        %v325 = vsel %vm324, %v316, %v322
        %v326 = vmax.f32 %v323, %v318
        %vm327 = vcmp.eq.s32.totalorder %v313, 2
        %v328 = vsel %vm327, %v318, %v325
        %v329 = vmax.f32 %v326, %v320
        %vm330 = vcmp.eq.s32.totalorder %v313, 3
        %v331 = vsel %vm330, %v320, %v328
        %v332 = vsub.f32 %v314, %v329
        %v333 = vmul.f32 %v332, 1.442695
        %v334 = vpow.pop %v333
        %v335 = vsub.f32 %v316, %v329
        %v336 = vmul.f32 %v335, 1.442695
        %v337 = vpow.pop %v336
        %v338 = vadd.f32 %v334, %v337
        %v339 = vsub.f32 %v318, %v329
        %v340 = vmul.f32 %v339, 1.442695
        %v341 = vpow.pop %v340
        %v342 = vadd.f32 %v338, %v341
        %v343 = vsub.f32 %v320, %v329
        %v344 = vmul.f32 %v343, 1.442695
        %v345 = vpow.pop %v344
        %v346 = vadd.f32 %v342, %v345
        %v347 = vlog2.pop %v346
        %v348 = vmul.f32 %v347, 0.6931472
        %v349 = vadd.f32 %v348, %v329
        %v350 = vsub.f32 %v349, %v331
        %v351 = vld [vmem:[#allocation2] sm:$0x3]
        %v352 = vmul.f32 %v312, %v350
        %v353 = vadd.f32 %v351, %v352
        %354 = vst [vmem:[#allocation2] sm:$0x3] %v353
        // Predicated region
        $region49: #{tpu_custom_call.1} parent=31 // pred_check
          %p355 = pneg %p307
        $region50: #{tpu_custom_call.1} parent=31 // pred_check_branch
          %357 = sbr.rel (%p355) target = $region52
        $region51: #{tpu_custom_call.1} parent=31 // pred_region
          %v358 = vld [vmem:[#allocation2] sm:$0x3]
          %vm359 = vcmask 1041408
          %v360 = vsel %vm359, %v358, 0.0
          %v361 = vrot.slane %v360, 4
          %v362 = vadd.f32 %v360, %v361
          %v363 = vrot.slane %v362, 2
          %v364 = vadd.f32 %v362, %v363
          %v365 = vrot.slane %v364, 1
          %v366 = vadd.f32 %v364, %v365
          %367 = vst [vmem:[%s303] sm:$0x1] %v366
        $region52: #{tpu_custom_call.1} parent=31 // pred_fallthru
          _
        %s368 = sand.u32 %s142, 1
        %s369 = scalar_lea.sflag [#allocation5], %s368
        %s370 = sand.u32 %s142, 1
        %s371 = scalar_lea.vmem [#allocation9], %s370
        // Predicated region
        $region53: #{tpu_custom_call.1} parent=31 // pred_check
          %p372 = pneg %p152
        $region54: #{tpu_custom_call.1} parent=31 // pred_check_branch
          %374 = sbr.rel (%p372) target = $region56
        $region55: #{tpu_custom_call.1} parent=31 // pred_region
          %376 = vsyncadd %s369, 0
          %s377 = sadd.s32 %s29, %s28
          %s378 = scalar_lea.hbm %s3, %s377
          %s380 = sshll.u32 %s371, 4
          %s381 = int_to_ptr.vmem [resolvable:$true] %s380
          %s382 = sshll.u32 %s378, 4
          %s383 = int_to_ptr.hbm [resolvable:$true] %s382
          %385 = dma.vmem_to_hbm [thread:$0]  %s381, 16, %s383, %s369
        $region56: #{tpu_custom_call.1} parent=31 // pred_fallthru
          _
      $region32: #{tpu_custom_call.1} parent=5 // pred_fallthru
        _
      %p386 = scmp.le.s32.totalorder 2, %s18
      // Predicated region
      $region57: #{tpu_custom_call.1} parent=5 // pred_check
        %p387 = pneg %p386
      $region58: #{tpu_custom_call.1} parent=5 // pred_check_branch
        %389 = sbr.rel (%p387) target = $region60
      $region59: #{tpu_custom_call.1} parent=5 // pred_region
        %s390 = ssub.s32 %s18, 2
        // Predicated region
        $region61: #{tpu_custom_call.1} parent=59 // pred_check
          %p391 = pneg %p158
        $region62: #{tpu_custom_call.1} parent=59 // pred_check_branch
          %393 = sbr.rel (%p391) target = $region64
        $region63: #{tpu_custom_call.1} parent=59 // pred_region
          %s394 = sand.u32 %s143, 1
          %s395 = scalar_lea.sflag [#allocation5], %s394
          %s396 = sand.u32 %s143, 1
          %s397 = scalar_lea.vmem [#allocation9], %s396
          %399 = dma.done %s395, 16
        $region64: #{tpu_custom_call.1} parent=59 // pred_fallthru
          _
      $region60: #{tpu_custom_call.1} parent=5 // pred_fallthru
        _
    $region6: #{tpu_custom_call.1} parent=1 // loop_footer
      %s22 = sadd.s32 1, %s18
    $region7: #{tpu_custom_call.1} parent=1 // loop_footer_branch
      %17 = sbr.rel target = $region3
    $region8: #{tpu_custom_call.1} parent=1 // loop_exit
      _
    %400 = vsyncpa [#allocation4], 1
    %s401 = scalar_lea.sflag [#allocation4], 1
    %402 = vsyncpa %s401, 1
    %403 = vsyncpa [#allocation7], 1
    %s404 = scalar_lea.sflag [#allocation7], 1
    %405 = vsyncpa %s404, 1
    %406 = vsyncpa [#allocation5], 1
    %s407 = scalar_lea.sflag [#allocation5], 1
    %408 = vsyncpa %s407, 1

</llo_original>
